<compile_context>
chip_gen: v7x
topology: tpu7x:2x2x1
jax: 0.10.0
libtpu: 0.0.40
codegen_flags: <defaults>
</compile_context>

<pallas_src>
import math

import numpy as np
import jax
import jax.numpy as jnp
from jax.experimental import pallas as pl
from jax.experimental.pallas import tpu as pltpu


def _round_up(x: int, m: int) -> int:
    return ((x + m - 1) // m) * m


def _pick_row_tile(ho: int) -> int:
    """Output-row tile.  TM=128 for large outputs (caps padding waste, matches the MXU);
    otherwise ~half the output rows (rounded to 16) so the 'parallel' grid axis has at
    least 2 steps for v7x's two TensorCores."""
    if ho > 256:
        return 128
    half = -(-ho // 2)
    return max(16, _round_up(half, 16))


def _build_interp_matrix(in_size: int, out_size: int, ratio: float) -> jnp.ndarray:
    """Row-sparse (2 taps/row) bilinear interpolation matrix, PyTorch semantics
    (align_corners=False, the *given* scale used for the coordinate mapping, source
    coordinates clamped to [0, in_size-1])."""
    dst = jnp.arange(out_size, dtype=jnp.float32)
    src = (dst + 0.5) * (1.0 / ratio) - 0.5
    src = jnp.clip(src, 0.0, float(in_size - 1))
    i0 = jnp.clip(jnp.floor(src).astype(jnp.int32), 0, in_size - 1)
    i1 = jnp.minimum(i0 + 1, in_size - 1)
    w1 = jnp.clip(src - i0.astype(jnp.float32), 0.0, 1.0)
    w0 = 1.0 - w1
    rows = jnp.arange(out_size)
    M = jnp.zeros((out_size, in_size), jnp.float32)
    M = M.at[rows, i0].add(w0)
    M = M.at[rows, i1].add(w1)
    return M


def _resize_kernel(img_ref, wy_ref, wxt_ref, o_ref):
    # img_ref : (C, H, W)        image dtype -- whole image resident in VMEM (1 copy)
    # wy_ref  : (TM, H)          bf16        -- row-interp tile for this grid step
    # wxt_ref : (W, Wo_pad)      bf16        -- whole col-interp matrix in VMEM (1 copy)
    # o_ref   : (C, TM, Wo_pad)  image dtype -- lane-dense (multiple-of-128) output slab
    num_channels = img_ref.shape[0]
    wy = wy_ref[...]
    wxt = wxt_ref[...]
    for c in range(num_channels):  # static unroll; one shared wxt tile, no kron blow-up
        img_c = img_ref[c].astype(jnp.bfloat16)                       # (H, W)
        rows = jnp.dot(wy, img_c, preferred_element_type=jnp.float32)  # (TM, W), f32 acc
        out_c = jnp.dot(rows.astype(jnp.bfloat16), wxt,
                        preferred_element_type=jnp.float32)            # (TM, Wo_pad)
        o_ref[c] = out_c.astype(o_ref.dtype)


def resize_attack(image: jnp.ndarray, ratio: float) -> jnp.ndarray:
    """Equivalent of ResizeAttack.forward for a CHW image and a given ratio."""
    C, H, W = image.shape
    Ho = int(math.floor(H * ratio))
    Wo = int(math.floor(W * ratio))

    # ---- padded / tiled geometry ---------------------------------------------
    Wo_pad = _round_up(Wo, 128)            # lane-dense output width (full vst, no vst.msk)
    TM = _pick_row_tile(Ho)
    Ho_pad = _round_up(Ho, TM)
    num_row_tiles = Ho_pad // TM

    # ---- interpolation matrices (zero-padded, bf16 for the MXU) ---------------
    wy = _build_interp_matrix(H, Ho, ratio)                        # (Ho, H)
    wy = jnp.zeros((Ho_pad, H), jnp.float32).at[:Ho, :].set(wy).astype(jnp.bfloat16)
    wxt = _build_interp_matrix(W, Wo, ratio).T                     # (W, Wo)
    wxt = jnp.zeros((W, Wo_pad), jnp.float32).at[:, :Wo].set(wxt).astype(jnp.bfloat16)

    out_dtype = image.dtype

    # ---- cost / VMEM hints -----------------------------------------------------
    img_bytes = C * H * W * int(jnp.dtype(image.dtype).itemsize)
    wy_bytes = Ho_pad * H * 2
    wxt_bytes = W * Wo_pad * 2
    out_itemsize = int(jnp.dtype(out_dtype).itemsize)
    out_bytes = C * Ho_pad * Wo_pad * out_itemsize
    wy_tile_bytes = TM * H * 2
    out_tile_bytes = C * TM * Wo_pad * out_itemsize
    # image + wxt are single-buffered whole-array residents; wy / output tiles are
    # double-buffered by the pipeline; ~2 MiB slack for in-kernel intermediates.
    vmem_needed = img_bytes + wxt_bytes + 2 * (wy_tile_bytes + out_tile_bytes) + (2 << 20)
    try:
        vmem_cap = int(pltpu.get_tpu_info().vmem_capacity_bytes)
    except Exception:
        vmem_cap = 64 * 1024 * 1024        # conservative fallback (v7x per-core capacity)
    vmem_limit = int(min(max(vmem_needed, 32 << 20), vmem_cap - (8 << 20)))

    cost = pl.CostEstimate(
        flops=2 * C * Ho_pad * W * (H + Wo_pad),   # per-channel, kron-free
        transcendentals=0,
        bytes_accessed=img_bytes + wy_bytes + wxt_bytes + out_bytes,
    )

    out = pl.pallas_call(
        _resize_kernel,
        out_shape=jax.ShapeDtypeStruct((C, Ho_pad, Wo_pad), out_dtype),
        grid=(num_row_tiles,),
        in_specs=[
            # Whole image in VMEM, fetched once, single-buffered (constant across grid).
            pl.BlockSpec(memory_space=pltpu.MemorySpace.VMEM),
            # Row-interp matrix: one (TM, H) tile per grid step (double-buffered, tiny).
            pl.BlockSpec((TM, H), lambda i: (i, 0)),
            # Whole Wx.T in VMEM, fetched once, single-buffered.
            pl.BlockSpec(memory_space=pltpu.MemorySpace.VMEM),
        ],
        out_specs=pl.BlockSpec((C, TM, Wo_pad), lambda i: (0, i, 0)),
        compiler_params=pltpu.CompilerParams(
            dimension_semantics=("parallel",),   # row tiles split across v7x's 2 TCs
            vmem_limit_bytes=vmem_limit,
        ),
        cost_estimate=cost,
    )(image, wy, wxt)

    # Only a slice remains on the wrapper side (no reshape / transpose / astype passes).
    out = out[:, :Ho, :Wo]
    # torch: interpolate(image[None], ...).squeeze() -> drop all size-1 dims.
    return jnp.squeeze(out)


if __name__ == "__main__":
    # Deterministic "random" resize ratio, same formula as the module.
    np.random.seed(0)
    resize_ratio_min, resize_ratio_max = 0.75, 1.0
    resize_ratio = float(
        np.random.rand() * (resize_ratio_max - resize_ratio_min) + resize_ratio_min
    )

    # Deterministic example input: CHW image (channels=4, spatial=16).
    key = jax.random.PRNGKey(0)
    image = jax.random.normal(key, (4, 16, 16), dtype=jnp.float32)

    out = resize_attack(image, resize_ratio)
    out = jax.block_until_ready(out)

    C, H, W = image.shape
    Ho = int(math.floor(H * resize_ratio))
    Wo = int(math.floor(W * resize_ratio))
    assert out.shape == (C, Ho, Wo), out.shape
    assert out.dtype == image.dtype, out.dtype

    # Pure-JAX f32 reference with the same separable formulation (loose tol for bf16).
    wy_ref = _build_interp_matrix(H, Ho, resize_ratio)
    wxt_ref = _build_interp_matrix(W, Wo, resize_ratio).T
    ref = jnp.einsum("oh,chw,wp->cop", wy_ref, image, wxt_ref)
    np.testing.assert_allclose(np.asarray(out), np.asarray(ref), atol=5e-2, rtol=5e-2)

    print("KERNEL_OK")
</pallas_src>

<mosaic_0001>
module attributes {stable_mosaic.version = 11 : i64} {
  func.func @_resize_kernel(%arg0: i32, %arg1: memref<4x16x16xf32, #tpu.memory_space<vmem>>, %arg2: memref<16x16xbf16, #tpu.memory_space<vmem>>, %arg3: memref<16x128xbf16, #tpu.memory_space<vmem>>, %arg4: memref<4x16x128xf32, #tpu.memory_space<vmem>>) attributes {dimension_semantics = [#tpu.dimension_semantics<parallel>], iteration_bounds = array<i64: 1>, scalar_prefetch = 0 : i64, scratch_operands = 0 : i64, tpu.core_type = #tpu.core_type<tc>, window_params = [{pipeline_mode = #tpu.pipeline_mode<synchronous>, transform_indices = @transform_0, window_bounds = array<i64: 4, 16, 16>}, {transform_indices = @transform_1, window_bounds = array<i64: 16, 16>}, {pipeline_mode = #tpu.pipeline_mode<synchronous>, transform_indices = @transform_2, window_bounds = array<i64: 16, 128>}, {transform_indices = @transform_3, window_bounds = array<i64: 4, 16, 128>}]} {
    %c0 = arith.constant 0 : index
    %c0_0 = arith.constant 0 : index
    %0 = vector.load %arg2[%c0, %c0_0] : memref<16x16xbf16, #tpu.memory_space<vmem>>, vector<16x16xbf16>
    %c0_1 = arith.constant 0 : index
    %c0_2 = arith.constant 0 : index
    %1 = vector.load %arg3[%c0_1, %c0_2] : memref<16x128xbf16, #tpu.memory_space<vmem>>, vector<16x128xbf16>
    %c0_3 = arith.constant 0 : index
    %c0_4 = arith.constant 0 : index
    %c0_5 = arith.constant 0 : index
    %2 = vector.load %arg1[%c0_3, %c0_4, %c0_5] : memref<4x16x16xf32, #tpu.memory_space<vmem>>, vector<1x16x16xf32>
    %3 = vector.shape_cast %2 : vector<1x16x16xf32> to vector<16x16xf32>
    %4 = arith.truncf %3 : vector<16x16xf32> to vector<16x16xbf16>
    %cst = arith.constant dense<0.000000e+00> : vector<16x16xf32>
    %5 = tpu.matmul %0, %4, %cst {dimension_numbers = #tpu.dot_dimension_numbers<[1], [0], [0], [1], [0, 0, 1, 1], [], []>} : vector<16x16xbf16>, vector<16x16xbf16>, vector<16x16xf32> -> vector<16x16xf32>
    %6 = arith.truncf %5 : vector<16x16xf32> to vector<16x16xbf16>
    %cst_6 = arith.constant dense<0.000000e+00> : vector<16x128xf32>
    %7 = tpu.matmul %6, %1, %cst_6 {dimension_numbers = #tpu.dot_dimension_numbers<[1], [0], [0], [1], [0, 0, 1, 1], [], []>} : vector<16x16xbf16>, vector<16x128xbf16>, vector<16x128xf32> -> vector<16x128xf32>
    %c0_7 = arith.constant 0 : index
    %c0_8 = arith.constant 0 : index
    %c0_9 = arith.constant 0 : index
    %8 = vector.load %arg4[%c0_7, %c0_8, %c0_9] : memref<4x16x128xf32, #tpu.memory_space<vmem>>, vector<1x16x128xf32>
    %9 = vector.shape_cast %8 : vector<1x16x128xf32> to vector<16x128xf32>
    %10 = vector.shape_cast %7 : vector<16x128xf32> to vector<1x16x128xf32>
    tpu.vector_store %arg4[%c0_7, %c0_8, %c0_9], %10 {strides = array<i32>} : memref<4x16x128xf32, #tpu.memory_space<vmem>>, vector<1x16x128xf32>,
    %c1 = arith.constant 1 : index
    %c0_10 = arith.constant 0 : index
    %c0_11 = arith.constant 0 : index
    %11 = vector.load %arg1[%c1, %c0_10, %c0_11] : memref<4x16x16xf32, #tpu.memory_space<vmem>>, vector<1x16x16xf32>
    %12 = vector.shape_cast %11 : vector<1x16x16xf32> to vector<16x16xf32>
    %13 = arith.truncf %12 : vector<16x16xf32> to vector<16x16xbf16>
    %cst_12 = arith.constant dense<0.000000e+00> : vector<16x16xf32>
    %14 = tpu.matmul %0, %13, %cst_12 {dimension_numbers = #tpu.dot_dimension_numbers<[1], [0], [0], [1], [0, 0, 1, 1], [], []>} : vector<16x16xbf16>, vector<16x16xbf16>, vector<16x16xf32> -> vector<16x16xf32>
    %15 = arith.truncf %14 : vector<16x16xf32> to vector<16x16xbf16>
    %cst_13 = arith.constant dense<0.000000e+00> : vector<16x128xf32>
    %16 = tpu.matmul %15, %1, %cst_13 {dimension_numbers = #tpu.dot_dimension_numbers<[1], [0], [0], [1], [0, 0, 1, 1], [], []>} : vector<16x16xbf16>, vector<16x128xbf16>, vector<16x128xf32> -> vector<16x128xf32>
    %c1_14 = arith.constant 1 : index
    %c0_15 = arith.constant 0 : index
    %c0_16 = arith.constant 0 : index
    %17 = vector.load %arg4[%c1_14, %c0_15, %c0_16] : memref<4x16x128xf32, #tpu.memory_space<vmem>>, vector<1x16x128xf32>
    %18 = vector.shape_cast %17 : vector<1x16x128xf32> to vector<16x128xf32>
    %19 = vector.shape_cast %16 : vector<16x128xf32> to vector<1x16x128xf32>
    tpu.vector_store %arg4[%c1_14, %c0_15, %c0_16], %19 {strides = array<i32>} : memref<4x16x128xf32, #tpu.memory_space<vmem>>, vector<1x16x128xf32>,
    %c2 = arith.constant 2 : index
    %c0_17 = arith.constant 0 : index
    %c0_18 = arith.constant 0 : index
    %20 = vector.load %arg1[%c2, %c0_17, %c0_18] : memref<4x16x16xf32, #tpu.memory_space<vmem>>, vector<1x16x16xf32>
    %21 = vector.shape_cast %20 : vector<1x16x16xf32> to vector<16x16xf32>
    %22 = arith.truncf %21 : vector<16x16xf32> to vector<16x16xbf16>
    %cst_19 = arith.constant dense<0.000000e+00> : vector<16x16xf32>
    %23 = tpu.matmul %0, %22, %cst_19 {dimension_numbers = #tpu.dot_dimension_numbers<[1], [0], [0], [1], [0, 0, 1, 1], [], []>} : vector<16x16xbf16>, vector<16x16xbf16>, vector<16x16xf32> -> vector<16x16xf32>
    %24 = arith.truncf %23 : vector<16x16xf32> to vector<16x16xbf16>
    %cst_20 = arith.constant dense<0.000000e+00> : vector<16x128xf32>
    %25 = tpu.matmul %24, %1, %cst_20 {dimension_numbers = #tpu.dot_dimension_numbers<[1], [0], [0], [1], [0, 0, 1, 1], [], []>} : vector<16x16xbf16>, vector<16x128xbf16>, vector<16x128xf32> -> vector<16x128xf32>
    %c2_21 = arith.constant 2 : index
    %c0_22 = arith.constant 0 : index
    %c0_23 = arith.constant 0 : index
    %26 = vector.load %arg4[%c2_21, %c0_22, %c0_23] : memref<4x16x128xf32, #tpu.memory_space<vmem>>, vector<1x16x128xf32>
    %27 = vector.shape_cast %26 : vector<1x16x128xf32> to vector<16x128xf32>
    %28 = vector.shape_cast %25 : vector<16x128xf32> to vector<1x16x128xf32>
    tpu.vector_store %arg4[%c2_21, %c0_22, %c0_23], %28 {strides = array<i32>} : memref<4x16x128xf32, #tpu.memory_space<vmem>>, vector<1x16x128xf32>,
    %c3 = arith.constant 3 : index
    %c0_24 = arith.constant 0 : index
    %c0_25 = arith.constant 0 : index
    %29 = vector.load %arg1[%c3, %c0_24, %c0_25] : memref<4x16x16xf32, #tpu.memory_space<vmem>>, vector<1x16x16xf32>
    %30 = vector.shape_cast %29 : vector<1x16x16xf32> to vector<16x16xf32>
    %31 = arith.truncf %30 : vector<16x16xf32> to vector<16x16xbf16>
    %cst_26 = arith.constant dense<0.000000e+00> : vector<16x16xf32>
    %32 = tpu.matmul %0, %31, %cst_26 {dimension_numbers = #tpu.dot_dimension_numbers<[1], [0], [0], [1], [0, 0, 1, 1], [], []>} : vector<16x16xbf16>, vector<16x16xbf16>, vector<16x16xf32> -> vector<16x16xf32>
    %33 = arith.truncf %32 : vector<16x16xf32> to vector<16x16xbf16>
    %cst_27 = arith.constant dense<0.000000e+00> : vector<16x128xf32>
    %34 = tpu.matmul %33, %1, %cst_27 {dimension_numbers = #tpu.dot_dimension_numbers<[1], [0], [0], [1], [0, 0, 1, 1], [], []>} : vector<16x16xbf16>, vector<16x128xbf16>, vector<16x128xf32> -> vector<16x128xf32>
    %c3_28 = arith.constant 3 : index
    %c0_29 = arith.constant 0 : index
    %c0_30 = arith.constant 0 : index
    %35 = vector.load %arg4[%c3_28, %c0_29, %c0_30] : memref<4x16x128xf32, #tpu.memory_space<vmem>>, vector<1x16x128xf32>
    %36 = vector.shape_cast %35 : vector<1x16x128xf32> to vector<16x128xf32>
    %37 = vector.shape_cast %34 : vector<16x128xf32> to vector<1x16x128xf32>
    tpu.vector_store %arg4[%c3_28, %c0_29, %c0_30], %37 {strides = array<i32>} : memref<4x16x128xf32, #tpu.memory_space<vmem>>, vector<1x16x128xf32>,
    return
  }
  func.func @transform_0(%arg0: i32) -> (i32, i32, i32) {
    %c0_i32 = arith.constant 0 : i32
    %c0_i32_0 = arith.constant 0 : i32
    %c0_i32_1 = arith.constant 0 : i32
    %c0_i32_2 = arith.constant 0 : i32
    return %c0_i32, %c0_i32_0, %c0_i32_1 : i32, i32, i32
  }
  func.func @transform_1(%arg0: i32) -> (i32, i32) {
    %c0_i32 = arith.constant 0 : i32
    %c0_i32_0 = arith.constant 0 : i32
    return %arg0, %c0_i32 : i32, i32
  }
  func.func @transform_2(%arg0: i32) -> (i32, i32) {
    %c0_i32 = arith.constant 0 : i32
    %c0_i32_0 = arith.constant 0 : i32
    %c0_i32_1 = arith.constant 0 : i32
    return %c0_i32, %c0_i32_0 : i32, i32
  }
  func.func @transform_3(%arg0: i32) -> (i32, i32, i32) {
    %c0_i32 = arith.constant 0 : i32
    %c0_i32_0 = arith.constant 0 : i32
    %c0_i32_1 = arith.constant 0 : i32
    return %c0_i32, %arg0, %c0_i32_0 : i32, i32, i32
  }
}

</mosaic_0001>

<llo_original>
// kernel: tpu_custom_call.1
$region0: #{tpu_custom_call.1}
  #allocation0 [shape = 'u32[]', space=smem, size = 0x4, offset = 0x4, fixed_abs, tag = 'smem constant byte address 0x4 - core index']
  #allocation1 [shape = 'u32[144,128]{1,0:T(1,128)}', space=vmem, size = 0x12000, scoped, tag = 'internal scratch']
  %s0 = inlined_call_operand.hbm [shape: f32[4,16,16], index: 0, kind: input, shape index: {}]
  %s1 = inlined_call_operand.hbm [shape: bf16[16,16], index: 1, kind: input, shape index: {}]
  %s2 = inlined_call_operand.hbm [shape: bf16[16,128], index: 2, kind: input, shape index: {}]
  %s3 = inlined_call_operand.hbm [shape: f32[4,16,128], index: 3, kind: output, shape index: {}]
  %s4 = sld [smem:[#allocation0]]
  $region34: #{tpu_custom_call.1} parent=0
    _
  %s6 = ssub.s32 1, %s4
  %s7 = scalar_select 0, %s6, %s4
  $region1: #{tpu_custom_call.1} parent=0
    #allocation2 [shape = 'u8[32768]{0}', space=vmem, size = 0x8000, scoped, tag = 'input window, operand 0, single buffered']
    #allocation3 [shape = 's32[1]{0}', space=sflag, size = 0x4, scoped, tag = 'scoped memory for tpu_custom_call.1']
    #allocation4 [shape = 's32[1]{0}', space=sflag, size = 0x4, scoped, tag = 'scoped memory for tpu_custom_call.1']
    #allocation5 [shape = 'u8[4096]{0}', space=vmem, size = 0x1000, scoped, tag = 'input window, operand 1, single buffered']
    #allocation6 [shape = 's32[1]{0}', space=sflag, size = 0x4, scoped, tag = 'scoped memory for tpu_custom_call.1']
    #allocation7 [shape = 'u8[4096]{0}', space=vmem, size = 0x1000, scoped, tag = 'input window, operand 2, single buffered']
    #allocation8 [shape = 'u8[32768]{0}', space=vmem, size = 0x8000, scoped, tag = 'output window, operand 0, single buffered']
    %8 = vsyncpa [#allocation3], 0
    %9 = vsyncpa [#allocation6], 0
    %10 = vsyncpa [#allocation4], 0
    // Predicated region
    $region2: #{tpu_custom_call.1} parent=1 // pred_check
      _
    $region3: #{tpu_custom_call.1} parent=1 // pred_check_branch
      %12 = sbr.rel (0) target = $region5
    $region4: #{tpu_custom_call.1} parent=1 // pred_region
      %s14 = ssub.s32 1024, 1024
      %15 = vsyncadd [#allocation3], %s14
      %s16 = sshll.u32 [#allocation2], 4
      %s17 = int_to_ptr.vmem [resolvable:$true] %s16
      %22 = dma.hbm_to_vmem [thread:$0]  %s0, 1024, %s17, [#allocation3], 128, 128, 8
    $region5: #{tpu_custom_call.1} parent=1 // pred_fallthru
      _
    // Predicated region
    $region6: #{tpu_custom_call.1} parent=1 // pred_check
      _
    $region7: #{tpu_custom_call.1} parent=1 // pred_check_branch
      %24 = sbr.rel (0) target = $region9
    $region8: #{tpu_custom_call.1} parent=1 // pred_region
      %s26 = ssub.s32 128, 128
      %27 = vsyncadd [#allocation6], %s26
      %s28 = sshll.u32 [#allocation5], 4
      %s29 = int_to_ptr.vmem [resolvable:$true] %s28
      %34 = dma.hbm_to_vmem [thread:$0]  %s1, 128, %s29, [#allocation6], 64, 64, 4
    $region9: #{tpu_custom_call.1} parent=1 // pred_fallthru
      _
    // Predicated region
    $region10: #{tpu_custom_call.1} parent=1 // pred_check
      _
    $region11: #{tpu_custom_call.1} parent=1 // pred_check_branch
      %36 = sbr.rel (0) target = $region13
    $region12: #{tpu_custom_call.1} parent=1 // pred_region
      %s38 = ssub.s32 128, 128
      %39 = vsyncadd [#allocation6], %s38
      %s40 = sshll.u32 [#allocation7], 4
      %s41 = int_to_ptr.vmem [resolvable:$true] %s40
      %46 = dma.hbm_to_vmem [thread:$0]  %s2, 128, %s41, [#allocation6], 64, 64, 4
    $region13: #{tpu_custom_call.1} parent=1 // pred_fallthru
      _
    // Predicated region
    $region14: #{tpu_custom_call.1} parent=1 // pred_check
      _
    $region15: #{tpu_custom_call.1} parent=1 // pred_check_branch
      %48 = sbr.rel (0) target = $region17
    $region16: #{tpu_custom_call.1} parent=1 // pred_region
      %49 = dma.done [#allocation3], 1024
    $region17: #{tpu_custom_call.1} parent=1 // pred_fallthru
      _
    // Predicated region
    $region18: #{tpu_custom_call.1} parent=1 // pred_check
      _
    $region19: #{tpu_custom_call.1} parent=1 // pred_check_branch
      %51 = sbr.rel (0) target = $region21
    $region20: #{tpu_custom_call.1} parent=1 // pred_region
      %52 = dma.done [#allocation6], 128
    $region21: #{tpu_custom_call.1} parent=1 // pred_fallthru
      _
    // Predicated region
    $region22: #{tpu_custom_call.1} parent=1 // pred_check
      _
    $region23: #{tpu_custom_call.1} parent=1 // pred_check_branch
      %54 = sbr.rel (0) target = $region25
    $region24: #{tpu_custom_call.1} parent=1 // pred_region
      %55 = dma.done [#allocation6], 128
    $region25: #{tpu_custom_call.1} parent=1 // pred_fallthru
      _
    %v57 = vld [vmem:[#allocation5] sm:$0xf]
    %v58 = vld [vmem:[#allocation5 + $0x4] sm:$0xf]
    %v59 = vld [vmem:[#allocation7] sm:$0xf]
    %v60 = vld [vmem:[#allocation7 + $0x4] sm:$0xf]
    %v61 = vld [vmem:[#allocation2] sm:$0xff]
    %v62 = vld [vmem:[#allocation2 + $0x8] sm:$0xff]
    %v63 = vpack.c.bf16 %v62, %v61
    %v66 = vunpack.c.l.b16 %v57
    %v67 = vunpack.c.l.b16 %v58
    %v68 = vpack.c.b16 %v67, %v66
    %vm69 = vcmask 130048
    %v71 = vsel %vm69, %v68, 0
    %73 = vmatprep.subr.bf16.mxu0 0
    %74 = vmatpush1.bf16.msra.mxu0 %v63
    %75 = vmatprep.subr.bf16.mxu0 0
    %76 = vmatpush1.bf16.msra.mxu0 0
    %77 = vmatprep.subr.bf16.mxu0 0
    %78 = vmatpush1.bf16.msra.mxu0 0
    %79 = vmatprep.subr.bf16.mxu0 0
    %80 = vmatpush1.bf16.msra.mxu0 0
    %81 = vmatprep.subr.bf16.mxu0 0
    %82 = vmatpush1.bf16.msra.mxu0 0
    %83 = vmatprep.subr.bf16.mxu0 0
    %84 = vmatpush1.bf16.msra.mxu0 0
    %85 = vmatprep.subr.bf16.mxu0 0
    %86 = vmatpush1.bf16.msra.mxu0 0
    %87 = vmatprep.subr.bf16.mxu0 0
    %88 = vmatpush1.bf16.msra.mxu0 0
    %89 = vmatprep.subr.bf16.mxu0 0
    %90 = vmatpush1.bf16.msra.mxu0 0
    %91 = vmatprep.subr.bf16.mxu0 0
    %92 = vmatpush1.bf16.msra.mxu0 0
    %93 = vmatprep.subr.bf16.mxu0 0
    %94 = vmatpush1.bf16.msra.mxu0 0
    %95 = vmatprep.subr.bf16.mxu0 0
    %96 = vmatpush1.bf16.msra.mxu0 0
    %97 = vmatprep.subr.bf16.mxu0 0
    %98 = vmatpush1.bf16.msra.mxu0 0
    %99 = vmatprep.subr.bf16.mxu0 0
    %100 = vmatpush1.bf16.msra.mxu0 0
    %101 = vmatprep.subr.bf16.mxu0 0
    %102 = vmatpush1.bf16.msra.mxu0 0
    %103 = vmatprep.subr.bf16.mxu0 0
    %104 = vmatpush1.bf16.msra.mxu0 0
    %105 = vmatprep.mubr.bf16.mxu0 0
    %106 = vmatmul.mubr.bf16.gmra.mrb[0].mxu0 %v71
    %v107 = vpop.f32.mrb[0].mxu0
    %v108 = vadd.f32 0.0, %v107
    %v109 = vpop.f32.mrb[0].mxu0
    %v110 = vpop.f32.mrb[0].mxu0
    %v111 = vadd.f32 0.0, %v110
    %v112 = vpop.f32.mrb[0].mxu0
    %113 = vdwg.mxu0
    %v114 = vpack.c.bf16 %v111, %v108
    %v117 = vunpack.c.l.b16 %v59
    %v118 = vunpack.c.l.b16 %v60
    %v119 = vpack.c.b16 %v118, %v117
    %v122 = vsel %vm69, %v114, 0
    %124 = vmatprep.subr.bf16.mxu0 0
    %125 = vmatpush1.bf16.msra.mxu0 %v119
    %126 = vmatprep.subr.bf16.mxu0 0
    %127 = vmatpush1.bf16.msra.mxu0 0
    %128 = vmatprep.subr.bf16.mxu0 0
    %129 = vmatpush1.bf16.msra.mxu0 0
    %130 = vmatprep.subr.bf16.mxu0 0
    %131 = vmatpush1.bf16.msra.mxu0 0
    %132 = vmatprep.subr.bf16.mxu0 0
    %133 = vmatpush1.bf16.msra.mxu0 0
    %134 = vmatprep.subr.bf16.mxu0 0
    %135 = vmatpush1.bf16.msra.mxu0 0
    %136 = vmatprep.subr.bf16.mxu0 0
    %137 = vmatpush1.bf16.msra.mxu0 0
    %138 = vmatprep.subr.bf16.mxu0 0
    %139 = vmatpush1.bf16.msra.mxu0 0
    %140 = vmatprep.subr.bf16.mxu0 0
    %141 = vmatpush1.bf16.msra.mxu0 0
    %142 = vmatprep.subr.bf16.mxu0 0
    %143 = vmatpush1.bf16.msra.mxu0 0
    %144 = vmatprep.subr.bf16.mxu0 0
    %145 = vmatpush1.bf16.msra.mxu0 0
    %146 = vmatprep.subr.bf16.mxu0 0
    %147 = vmatpush1.bf16.msra.mxu0 0
    %148 = vmatprep.subr.bf16.mxu0 0
    %149 = vmatpush1.bf16.msra.mxu0 0
    %150 = vmatprep.subr.bf16.mxu0 0
    %151 = vmatpush1.bf16.msra.mxu0 0
    %152 = vmatprep.subr.bf16.mxu0 0
    %153 = vmatpush1.bf16.msra.mxu0 0
    %154 = vmatprep.subr.bf16.mxu0 0
    %155 = vmatpush1.bf16.msra.mxu0 0
    %156 = vmatprep.mubr.bf16.mxu0 0
    %157 = vmatmul.mubr.bf16.gmra.mrb[0].mxu0 %v122
    %v158 = vpop.f32.mrb[0].mxu0
    %v159 = vadd.f32 0.0, %v158
    %v160 = vpop.f32.mrb[0].mxu0
    %v161 = vpop.f32.mrb[0].mxu0
    %v162 = vadd.f32 0.0, %v161
    %v163 = vpop.f32.mrb[0].mxu0
    %164 = vdwg.mxu0
    %165 = vst [vmem:[#allocation8] sm:$0xff] %v159
    %166 = vst [vmem:[#allocation8 + $0x8] sm:$0xff] %v162
    %s167 = scalar_lea.vmem [#allocation2], 16
    %v168 = vld [vmem:[%s167] sm:$0xff]
    %v169 = vld [vmem:[%s167 + $0x8] sm:$0xff]
    %v170 = vpack.c.bf16 %v169, %v168
    %171 = vmatprep.subr.bf16.mxu0 0
    %172 = vmatpush1.bf16.msra.mxu0 %v170
    %173 = vmatprep.subr.bf16.mxu0 0
    %174 = vmatpush1.bf16.msra.mxu0 0
    %175 = vmatprep.subr.bf16.mxu0 0
    %176 = vmatpush1.bf16.msra.mxu0 0
    %177 = vmatprep.subr.bf16.mxu0 0
    %178 = vmatpush1.bf16.msra.mxu0 0
    %179 = vmatprep.subr.bf16.mxu0 0
    %180 = vmatpush1.bf16.msra.mxu0 0
    %181 = vmatprep.subr.bf16.mxu0 0
    %182 = vmatpush1.bf16.msra.mxu0 0
    %183 = vmatprep.subr.bf16.mxu0 0
    %184 = vmatpush1.bf16.msra.mxu0 0
    %185 = vmatprep.subr.bf16.mxu0 0
    %186 = vmatpush1.bf16.msra.mxu0 0
    %187 = vmatprep.subr.bf16.mxu0 0
    %188 = vmatpush1.bf16.msra.mxu0 0
    %189 = vmatprep.subr.bf16.mxu0 0
    %190 = vmatpush1.bf16.msra.mxu0 0
    %191 = vmatprep.subr.bf16.mxu0 0
    %192 = vmatpush1.bf16.msra.mxu0 0
    %193 = vmatprep.subr.bf16.mxu0 0
    %194 = vmatpush1.bf16.msra.mxu0 0
    %195 = vmatprep.subr.bf16.mxu0 0
    %196 = vmatpush1.bf16.msra.mxu0 0
    %197 = vmatprep.subr.bf16.mxu0 0
    %198 = vmatpush1.bf16.msra.mxu0 0
    %199 = vmatprep.subr.bf16.mxu0 0
    %200 = vmatpush1.bf16.msra.mxu0 0
    %201 = vmatprep.subr.bf16.mxu0 0
    %202 = vmatpush1.bf16.msra.mxu0 0
    %203 = vmatprep.mubr.bf16.mxu0 0
    %204 = vmatmul.mubr.bf16.gmra.mrb[0].mxu0 %v71
    %v205 = vpop.f32.mrb[0].mxu0
    %v206 = vadd.f32 0.0, %v205
    %v207 = vpop.f32.mrb[0].mxu0
    %v208 = vpop.f32.mrb[0].mxu0
    %v209 = vadd.f32 0.0, %v208
    %v210 = vpop.f32.mrb[0].mxu0
    %211 = vdwg.mxu0
    %v212 = vpack.c.bf16 %v209, %v206
    %v214 = vsel %vm69, %v212, 0
    %216 = vmatprep.subr.bf16.mxu0 0
    %217 = vmatpush1.bf16.msra.mxu0 %v119
    %218 = vmatprep.subr.bf16.mxu0 0
    %219 = vmatpush1.bf16.msra.mxu0 0
    %220 = vmatprep.subr.bf16.mxu0 0
    %221 = vmatpush1.bf16.msra.mxu0 0
    %222 = vmatprep.subr.bf16.mxu0 0
    %223 = vmatpush1.bf16.msra.mxu0 0
    %224 = vmatprep.subr.bf16.mxu0 0
    %225 = vmatpush1.bf16.msra.mxu0 0
    %226 = vmatprep.subr.bf16.mxu0 0
    %227 = vmatpush1.bf16.msra.mxu0 0
    %228 = vmatprep.subr.bf16.mxu0 0
    %229 = vmatpush1.bf16.msra.mxu0 0
    %230 = vmatprep.subr.bf16.mxu0 0
    %231 = vmatpush1.bf16.msra.mxu0 0
    %232 = vmatprep.subr.bf16.mxu0 0
    %233 = vmatpush1.bf16.msra.mxu0 0
    %234 = vmatprep.subr.bf16.mxu0 0
    %235 = vmatpush1.bf16.msra.mxu0 0
    %236 = vmatprep.subr.bf16.mxu0 0
    %237 = vmatpush1.bf16.msra.mxu0 0
    %238 = vmatprep.subr.bf16.mxu0 0
    %239 = vmatpush1.bf16.msra.mxu0 0
    %240 = vmatprep.subr.bf16.mxu0 0
    %241 = vmatpush1.bf16.msra.mxu0 0
    %242 = vmatprep.subr.bf16.mxu0 0
    %243 = vmatpush1.bf16.msra.mxu0 0
    %244 = vmatprep.subr.bf16.mxu0 0
    %245 = vmatpush1.bf16.msra.mxu0 0
    %246 = vmatprep.subr.bf16.mxu0 0
    %247 = vmatpush1.bf16.msra.mxu0 0
    %248 = vmatprep.mubr.bf16.mxu0 0
    %249 = vmatmul.mubr.bf16.gmra.mrb[0].mxu0 %v214
    %v250 = vpop.f32.mrb[0].mxu0
    %v251 = vadd.f32 0.0, %v250
    %v252 = vpop.f32.mrb[0].mxu0
    %v253 = vpop.f32.mrb[0].mxu0
    %v254 = vadd.f32 0.0, %v253
    %v255 = vpop.f32.mrb[0].mxu0
    %256 = vdwg.mxu0
    %s257 = scalar_lea.vmem [#allocation8], 16
    %258 = vst [vmem:[%s257] sm:$0xff] %v251
    %259 = vst [vmem:[%s257 + $0x8] sm:$0xff] %v254
    %s260 = scalar_lea.vmem [#allocation2], 32
    %v261 = vld [vmem:[%s260] sm:$0xff]
    %v262 = vld [vmem:[%s260 + $0x8] sm:$0xff]
    %v263 = vpack.c.bf16 %v262, %v261
    %264 = vmatprep.subr.bf16.mxu0 0
    %265 = vmatpush1.bf16.msra.mxu0 %v263
    %266 = vmatprep.subr.bf16.mxu0 0
    %267 = vmatpush1.bf16.msra.mxu0 0
    %268 = vmatprep.subr.bf16.mxu0 0
    %269 = vmatpush1.bf16.msra.mxu0 0
    %270 = vmatprep.subr.bf16.mxu0 0
    %271 = vmatpush1.bf16.msra.mxu0 0
    %272 = vmatprep.subr.bf16.mxu0 0
    %273 = vmatpush1.bf16.msra.mxu0 0
    %274 = vmatprep.subr.bf16.mxu0 0
    %275 = vmatpush1.bf16.msra.mxu0 0
    %276 = vmatprep.subr.bf16.mxu0 0
    %277 = vmatpush1.bf16.msra.mxu0 0
    %278 = vmatprep.subr.bf16.mxu0 0
    %279 = vmatpush1.bf16.msra.mxu0 0
    %280 = vmatprep.subr.bf16.mxu0 0
    %281 = vmatpush1.bf16.msra.mxu0 0
    %282 = vmatprep.subr.bf16.mxu0 0
    %283 = vmatpush1.bf16.msra.mxu0 0
    %284 = vmatprep.subr.bf16.mxu0 0
    %285 = vmatpush1.bf16.msra.mxu0 0
    %286 = vmatprep.subr.bf16.mxu0 0
    %287 = vmatpush1.bf16.msra.mxu0 0
    %288 = vmatprep.subr.bf16.mxu0 0
    %289 = vmatpush1.bf16.msra.mxu0 0
    %290 = vmatprep.subr.bf16.mxu0 0
    %291 = vmatpush1.bf16.msra.mxu0 0
    %292 = vmatprep.subr.bf16.mxu0 0
    %293 = vmatpush1.bf16.msra.mxu0 0
    %294 = vmatprep.subr.bf16.mxu0 0
    %295 = vmatpush1.bf16.msra.mxu0 0
    %296 = vmatprep.mubr.bf16.mxu0 0
    %297 = vmatmul.mubr.bf16.gmra.mrb[0].mxu0 %v71
    %v298 = vpop.f32.mrb[0].mxu0
    %v299 = vadd.f32 0.0, %v298
    %v300 = vpop.f32.mrb[0].mxu0
    %v301 = vpop.f32.mrb[0].mxu0
    %v302 = vadd.f32 0.0, %v301
    %v303 = vpop.f32.mrb[0].mxu0
    %304 = vdwg.mxu0
    %v305 = vpack.c.bf16 %v302, %v299
    %v307 = vsel %vm69, %v305, 0
    %309 = vmatprep.subr.bf16.mxu0 0
    %310 = vmatpush1.bf16.msra.mxu0 %v119
    %311 = vmatprep.subr.bf16.mxu0 0
    %312 = vmatpush1.bf16.msra.mxu0 0
    %313 = vmatprep.subr.bf16.mxu0 0
    %314 = vmatpush1.bf16.msra.mxu0 0
    %315 = vmatprep.subr.bf16.mxu0 0
    %316 = vmatpush1.bf16.msra.mxu0 0
    %317 = vmatprep.subr.bf16.mxu0 0
    %318 = vmatpush1.bf16.msra.mxu0 0
    %319 = vmatprep.subr.bf16.mxu0 0
    %320 = vmatpush1.bf16.msra.mxu0 0
    %321 = vmatprep.subr.bf16.mxu0 0
    %322 = vmatpush1.bf16.msra.mxu0 0
    %323 = vmatprep.subr.bf16.mxu0 0
    %324 = vmatpush1.bf16.msra.mxu0 0
    %325 = vmatprep.subr.bf16.mxu0 0
    %326 = vmatpush1.bf16.msra.mxu0 0
    %327 = vmatprep.subr.bf16.mxu0 0
    %328 = vmatpush1.bf16.msra.mxu0 0
    %329 = vmatprep.subr.bf16.mxu0 0
    %330 = vmatpush1.bf16.msra.mxu0 0
    %331 = vmatprep.subr.bf16.mxu0 0
    %332 = vmatpush1.bf16.msra.mxu0 0
    %333 = vmatprep.subr.bf16.mxu0 0
    %334 = vmatpush1.bf16.msra.mxu0 0
    %335 = vmatprep.subr.bf16.mxu0 0
    %336 = vmatpush1.bf16.msra.mxu0 0
    %337 = vmatprep.subr.bf16.mxu0 0
    %338 = vmatpush1.bf16.msra.mxu0 0
    %339 = vmatprep.subr.bf16.mxu0 0
    %340 = vmatpush1.bf16.msra.mxu0 0
    %341 = vmatprep.mubr.bf16.mxu0 0
    %342 = vmatmul.mubr.bf16.gmra.mrb[0].mxu0 %v307
    %v343 = vpop.f32.mrb[0].mxu0
    %v344 = vadd.f32 0.0, %v343
    %v345 = vpop.f32.mrb[0].mxu0
    %v346 = vpop.f32.mrb[0].mxu0
    %v347 = vadd.f32 0.0, %v346
    %v348 = vpop.f32.mrb[0].mxu0
    %349 = vdwg.mxu0
    %s350 = scalar_lea.vmem [#allocation8], 32
    %351 = vst [vmem:[%s350] sm:$0xff] %v344
    %352 = vst [vmem:[%s350 + $0x8] sm:$0xff] %v347
    %s353 = scalar_lea.vmem [#allocation2], 48
    %v354 = vld [vmem:[%s353] sm:$0xff]
    %v355 = vld [vmem:[%s353 + $0x8] sm:$0xff]
    %v356 = vpack.c.bf16 %v355, %v354
    %357 = vmatprep.subr.bf16.mxu0 0
    %358 = vmatpush1.bf16.msra.mxu0 %v356
    %359 = vmatprep.subr.bf16.mxu0 0
    %360 = vmatpush1.bf16.msra.mxu0 0
    %361 = vmatprep.subr.bf16.mxu0 0
    %362 = vmatpush1.bf16.msra.mxu0 0
    %363 = vmatprep.subr.bf16.mxu0 0
    %364 = vmatpush1.bf16.msra.mxu0 0
    %365 = vmatprep.subr.bf16.mxu0 0
    %366 = vmatpush1.bf16.msra.mxu0 0
    %367 = vmatprep.subr.bf16.mxu0 0
    %368 = vmatpush1.bf16.msra.mxu0 0
    %369 = vmatprep.subr.bf16.mxu0 0
    %370 = vmatpush1.bf16.msra.mxu0 0
    %371 = vmatprep.subr.bf16.mxu0 0
    %372 = vmatpush1.bf16.msra.mxu0 0
    %373 = vmatprep.subr.bf16.mxu0 0
    %374 = vmatpush1.bf16.msra.mxu0 0
    %375 = vmatprep.subr.bf16.mxu0 0
    %376 = vmatpush1.bf16.msra.mxu0 0
    %377 = vmatprep.subr.bf16.mxu0 0
    %378 = vmatpush1.bf16.msra.mxu0 0
    %379 = vmatprep.subr.bf16.mxu0 0
    %380 = vmatpush1.bf16.msra.mxu0 0
    %381 = vmatprep.subr.bf16.mxu0 0
    %382 = vmatpush1.bf16.msra.mxu0 0
    %383 = vmatprep.subr.bf16.mxu0 0
    %384 = vmatpush1.bf16.msra.mxu0 0
    %385 = vmatprep.subr.bf16.mxu0 0
    %386 = vmatpush1.bf16.msra.mxu0 0
    %387 = vmatprep.subr.bf16.mxu0 0
    %388 = vmatpush1.bf16.msra.mxu0 0
    %389 = vmatprep.mubr.bf16.mxu0 0
    %390 = vmatmul.mubr.bf16.gmra.mrb[0].mxu0 %v71
    %v391 = vpop.f32.mrb[0].mxu0
    %v392 = vadd.f32 0.0, %v391
    %v393 = vpop.f32.mrb[0].mxu0
    %v394 = vpop.f32.mrb[0].mxu0
    %v395 = vadd.f32 0.0, %v394
    %v396 = vpop.f32.mrb[0].mxu0
    %397 = vdwg.mxu0
    %v398 = vpack.c.bf16 %v395, %v392
    %v400 = vsel %vm69, %v398, 0
    %402 = vmatprep.subr.bf16.mxu0 0
    %403 = vmatpush1.bf16.msra.mxu0 %v119
    %404 = vmatprep.subr.bf16.mxu0 0
    %405 = vmatpush1.bf16.msra.mxu0 0
    %406 = vmatprep.subr.bf16.mxu0 0
    %407 = vmatpush1.bf16.msra.mxu0 0
    %408 = vmatprep.subr.bf16.mxu0 0
    %409 = vmatpush1.bf16.msra.mxu0 0
    %410 = vmatprep.subr.bf16.mxu0 0
    %411 = vmatpush1.bf16.msra.mxu0 0
    %412 = vmatprep.subr.bf16.mxu0 0
    %413 = vmatpush1.bf16.msra.mxu0 0
    %414 = vmatprep.subr.bf16.mxu0 0
    %415 = vmatpush1.bf16.msra.mxu0 0
    %416 = vmatprep.subr.bf16.mxu0 0
    %417 = vmatpush1.bf16.msra.mxu0 0
    %418 = vmatprep.subr.bf16.mxu0 0
    %419 = vmatpush1.bf16.msra.mxu0 0
    %420 = vmatprep.subr.bf16.mxu0 0
    %421 = vmatpush1.bf16.msra.mxu0 0
    %422 = vmatprep.subr.bf16.mxu0 0
    %423 = vmatpush1.bf16.msra.mxu0 0
    %424 = vmatprep.subr.bf16.mxu0 0
    %425 = vmatpush1.bf16.msra.mxu0 0
    %426 = vmatprep.subr.bf16.mxu0 0
    %427 = vmatpush1.bf16.msra.mxu0 0
    %428 = vmatprep.subr.bf16.mxu0 0
    %429 = vmatpush1.bf16.msra.mxu0 0
    %430 = vmatprep.subr.bf16.mxu0 0
    %431 = vmatpush1.bf16.msra.mxu0 0
    %432 = vmatprep.subr.bf16.mxu0 0
    %433 = vmatpush1.bf16.msra.mxu0 0
    %434 = vmatprep.mubr.bf16.mxu0 0
    %435 = vmatmul.mubr.bf16.gmra.mrb[0].mxu0 %v400
    %v436 = vpop.f32.mrb[0].mxu0
    %v437 = vadd.f32 0.0, %v436
    %v438 = vpop.f32.mrb[0].mxu0
    %v439 = vpop.f32.mrb[0].mxu0
    %v440 = vadd.f32 0.0, %v439
    %v441 = vpop.f32.mrb[0].mxu0
    %442 = vdwg.mxu0
    %s443 = scalar_lea.vmem [#allocation8], 48
    %444 = vst [vmem:[%s443] sm:$0xff] %v437
    %445 = vst [vmem:[%s443 + $0x8] sm:$0xff] %v440
    // Predicated region
    $region26: #{tpu_custom_call.1} parent=1 // pred_check
      _
    $region27: #{tpu_custom_call.1} parent=1 // pred_check_branch
      %447 = sbr.rel (0) target = $region29
    $region28: #{tpu_custom_call.1} parent=1 // pred_region
      %s449 = ssub.s32 1024, 1024
      %450 = vsyncadd [#allocation4], %s449
      %s451 = sshll.u32 [#allocation8], 4
      %s452 = int_to_ptr.vmem [resolvable:$true] %s451
      %457 = dma.vmem_to_hbm [thread:$0]  %s452, 1024, %s3, [#allocation4], 128, 128, 8
    $region29: #{tpu_custom_call.1} parent=1 // pred_fallthru
      _
    // Predicated region
    $region30: #{tpu_custom_call.1} parent=1 // pred_check
      _
    $region31: #{tpu_custom_call.1} parent=1 // pred_check_branch
      %459 = sbr.rel (0) target = $region33
    $region32: #{tpu_custom_call.1} parent=1 // pred_region
      %460 = dma.done [#allocation4], 1024
    $region33: #{tpu_custom_call.1} parent=1 // pred_fallthru
      _
    %461 = vsyncpa [#allocation3], 1
    %462 = vsyncpa [#allocation6], 1
    %463 = vsyncpa [#allocation4], 1

</llo_original>
